<compile_context>
chip_gen: v6e
topology: v6e:2x2x1
jax: 0.10.0
libtpu: 0.0.40
codegen_flags: <defaults>
</compile_context>

<pallas_src>
import functools

import jax
import jax.numpy as jnp
from jax.experimental import pallas as pl
from jax.experimental.pallas import tpu as pltpu


def _mean_cat_tanh_kernel(x_ref, o_ref):
    # x_ref: (TB, C, D) block in VMEM ; o_ref: (TB, 2*D) block in VMEM.
    c = x_ref.shape[1]
    d = x_ref.shape[2]
    # Sum over C accumulating in f32 (no materialized f32 copy of the tile),
    # then mean as a scalar-constant multiply (1/C) -- no vector divide.
    s = jnp.sum(x_ref[...], axis=1, dtype=jnp.float32)          # (TB, D) f32
    t = jnp.tanh(s * jnp.float32(1.0 / c)).astype(o_ref.dtype)  # EUP tanh
    # tanh(cat(y, y)) == cat(tanh(y), tanh(y)): write t twice, no concatenate.
    o_ref[:, :d] = t
    o_ref[:, d:] = t


def _pick_batch_tile(B, C, D, in_itemsize):
    """Largest batch tile (multiple of 8 when tiling) whose double-buffered
    working set stays well under the scoped-VMEM limit on v5e/v6e/v7x."""
    per_row = (2 * C * D * in_itemsize          # 2x input buffers
               + 2 * 2 * D * in_itemsize        # 2x output buffers
               + 3 * D * 4)                     # f32 intermediates
    budget = 20 * 1024 * 1024                   # headroom under 32 MiB scoped
    tb = budget // max(per_row, 1)
    if tb >= B:
        return B                                # whole batch in one block
    return max(8, (tb // 8) * 8)                # keep (8,128) tiling happy


@functools.partial(jax.jit, static_argnames=("batch_tile",))
def model_forward(x: jax.Array, *, batch_tile: int | None = None) -> jax.Array:
    """Equivalent of Model.forward for x of shape (B, C, D) -> (B, 2*D)."""
    B, C, D = x.shape
    tb = batch_tile if batch_tile is not None else _pick_batch_tile(
        B, C, D, jnp.dtype(x.dtype).itemsize)
    grid = (pl.cdiv(B, tb),)
    return pl.pallas_call(
        _mean_cat_tanh_kernel,
        out_shape=jax.ShapeDtypeStruct((B, 2 * D), x.dtype),
        grid=grid,
        in_specs=[pl.BlockSpec((tb, C, D), lambda i: (i, 0, 0))],
        out_specs=pl.BlockSpec((tb, 2 * D), lambda i: (i, 0)),
        compiler_params=pltpu.CompilerParams(
            dimension_semantics=("parallel",),     # megacore shard on v7x
            vmem_limit_bytes=32 * 1024 * 1024,     # safe on v5e/v6e/v7x
        ),
    )(x)


def _reference(x: jax.Array) -> jax.Array:
    y = jnp.mean(x, axis=1)
    y = jnp.concatenate((y, y), axis=1)
    return jnp.tanh(y)


if __name__ == "__main__":
    key = jax.random.PRNGKey(0)

    # 1) Spec-sized input: x = torch.randn(2, 3, 4)
    x = jax.random.normal(key, (2, 3, 4), dtype=jnp.float32)
    out = jax.block_until_ready(model_forward(x))
    ref = _reference(x)
    assert out.shape == (2, 8), out.shape
    assert jnp.allclose(out, ref, atol=1e-5, rtol=1e-5)

    # 2) Larger check exercising the batch-tiled grid (incl. a partial block).
    key2 = jax.random.PRNGKey(1)
    x2 = jax.random.normal(key2, (300, 5, 64), dtype=jnp.float32)
    out2 = jax.block_until_ready(model_forward(x2, batch_tile=128))
    ref2 = _reference(x2)
    assert out2.shape == (300, 128), out2.shape
    assert jnp.allclose(out2, ref2, atol=1e-5, rtol=1e-5)

    print("KERNEL_OK")
</pallas_src>

<mosaic_0001>
module attributes {stable_mosaic.version = 11 : i64} {
  func.func @_mean_cat_tanh_kernel(%arg0: i32, %arg1: memref<2x3x4xf32, #tpu.memory_space<vmem>>, %arg2: memref<2x8xf32, #tpu.memory_space<vmem>>) attributes {dimension_semantics = [#tpu.dimension_semantics<parallel>], iteration_bounds = array<i64: 1>, scalar_prefetch = 0 : i64, scratch_operands = 0 : i64, tpu.core_type = #tpu.core_type<tc>, window_params = [{transform_indices = @transform_0, window_bounds = array<i64: 2, 3, 4>}, {transform_indices = @transform_1, window_bounds = array<i64: 2, 8>}]} {
    %c0 = arith.constant 0 : index
    %c0_0 = arith.constant 0 : index
    %c0_1 = arith.constant 0 : index
    %0 = vector.load %arg1[%c0, %c0_0, %c0_1] : memref<2x3x4xf32, #tpu.memory_space<vmem>>, vector<2x3x4xf32>
    %cst = arith.constant dense<0.000000e+00> : vector<2x4xf32>
    %1 = vector.multi_reduction <add>, %0, %cst [1] : vector<2x3x4xf32> to vector<2x4xf32>
    %cst_2 = arith.constant 0.333333343 : f32
    %2 = vector.broadcast %cst_2 : f32 to vector<2x4xf32>
    %3 = arith.mulf %1, %2 : vector<2x4xf32>
    %4 = math.tanh %3 : vector<2x4xf32>
    %c0_3 = arith.constant 0 : index
    %c0_4 = arith.constant 0 : index
    %5 = vector.load %arg2[%c0_3, %c0_4] : memref<2x8xf32, #tpu.memory_space<vmem>>, vector<2x4xf32>
    tpu.vector_store %arg2[%c0_3, %c0_4], %4 {strides = array<i32>} : memref<2x8xf32, #tpu.memory_space<vmem>>, vector<2x4xf32>,
    %c0_5 = arith.constant 0 : index
    %c4 = arith.constant 4 : index
    %6 = vector.load %arg2[%c0_5, %c4] : memref<2x8xf32, #tpu.memory_space<vmem>>, vector<2x4xf32>
    tpu.vector_store %arg2[%c0_5, %c4], %4 {strides = array<i32>} : memref<2x8xf32, #tpu.memory_space<vmem>>, vector<2x4xf32>,
    return
  }
  func.func @transform_0(%arg0: i32) -> (i32, i32, i32) {
    %c0_i32 = arith.constant 0 : i32
    %c0_i32_0 = arith.constant 0 : i32
    %c0_i32_1 = arith.constant 0 : i32
    return %arg0, %c0_i32, %c0_i32_0 : i32, i32, i32
  }
  func.func @transform_1(%arg0: i32) -> (i32, i32) {
    %c0_i32 = arith.constant 0 : i32
    %c0_i32_0 = arith.constant 0 : i32
    return %arg0, %c0_i32 : i32, i32
  }
}

</mosaic_0001>

<llo_original>
// kernel: model_forward.1
$region0: #{model_forward.1}
  #allocation0 [shape = 'u32[]', space=smem, size = 0x4, offset = 0x4, fixed_abs, tag = 'smem constant byte address 0x4 - core index']
  #allocation1 [shape = 'u32[144,128]{1,0:T(1,128)}', space=vmem, size = 0x12000, scoped, tag = 'internal scratch']
  %s0 = inlined_call_operand.vmem [shape: f32[2,3,4], index: 0, kind: input, shape index: {}]
  %s1 = inlined_call_operand.hbm [shape: f32[2,8], index: 1, kind: output, shape index: {}]
  %s2 = sld [smem:[#allocation0]]
  $region14: #{model_forward.1} parent=0
    _
  %s4 = ssub.s32 1, %s2
  %s5 = scalar_select 0, %s4, %s2
  $region1: #{model_forward.1} parent=0
    #allocation2 [shape = 'u8[1024]{0}', space=vmem, size = 0x400, scoped, tag = 'output window, operand 0, single buffered']
    #allocation3 [shape = 's32[1]{0}', space=sflag, size = 0x4, scoped, tag = 'scoped memory for model_forward.1']
    %6 = vsyncpa [#allocation3], 0
    // Predicated region
    $region2: #{model_forward.1} parent=1 // pred_check
      _
    $region3: #{model_forward.1} parent=1 // pred_check_branch
      %8 = sbr.rel (0) target = $region5
    $region4: #{model_forward.1} parent=1 // pred_region
      _
    $region5: #{model_forward.1} parent=1 // pred_fallthru
      _
    %v9 = vld [vmem:[%s0] sm:$0x7]
    %v10 = vld [vmem:[%s0 + $0x4] sm:$0x7]
    %vm11 = vcmask 26624
    %v12 = vsel %vm11, %v9, 0.0
    %v13 = vrot.slane %v12, 4
    %v14 = vadd.f32 %v12, %v13
    %v15 = vrot.slane %v14, 2
    %v16 = vadd.f32 %v14, %v15
    %v17 = vrot.slane %v16, 1
    %v18 = vadd.f32 %v16, %v17
    %v19 = vsel %vm11, %v10, 0.0
    %v20 = vrot.slane %v19, 4
    %v21 = vadd.f32 %v19, %v20
    %v22 = vrot.slane %v21, 2
    %v23 = vadd.f32 %v21, %v22
    %v24 = vrot.slane %v23, 1
    %v25 = vadd.f32 %v23, %v24
    %v26 = vmul.f32 %v18, 0.33333334
    %v27 = vmul.f32 %v25, 0.33333334
    %v28 = vtanh.pop %v26
    %v29 = vtanh.pop %v27
    %vm32 = vcmask 1041409
    %v33 = vsel %vm32, %v29, %v28
    %vm35 = vcmask 25600
    %36 = vst.msk [vmem:[#allocation2] sm:$0x3] %vm35, %v33
    %37 = vrot.lane.b32.xlu0 %v33, 4
    %v38 = vpop.permute.xlu0 %37
    %vm40 = vcmask 58400
    %41 = vst.msk [vmem:[#allocation2] sm:$0x3] %vm40, %v38
    // Predicated region
    $region6: #{model_forward.1} parent=1 // pred_check
      _
    $region7: #{model_forward.1} parent=1 // pred_check_branch
      %43 = sbr.rel (0) target = $region9
    $region8: #{model_forward.1} parent=1 // pred_region
      %s45 = ssub.s32 32, 32
      %46 = vsyncadd [#allocation3], %s45
      %s48 = sshll.u32 [#allocation2], 4
      %s49 = int_to_ptr.vmem [resolvable:$true] %s48
      %51 = dma.vmem_to_hbm [thread:$0]  %s49, 32, %s1, [#allocation3]
    $region9: #{model_forward.1} parent=1 // pred_fallthru
      _
    // Predicated region
    $region10: #{model_forward.1} parent=1 // pred_check
      _
    $region11: #{model_forward.1} parent=1 // pred_check_branch
      %53 = sbr.rel (0) target = $region13
    $region12: #{model_forward.1} parent=1 // pred_region
      %54 = dma.done [#allocation3], 32
    $region13: #{model_forward.1} parent=1 // pred_fallthru
      _
    %55 = vsyncpa [#allocation3], 1

</llo_original>
